<compile_context>
chip_gen: v6e
topology: v6e:2x2x1
jax: 0.10.0
libtpu: 0.0.40
codegen_flags: <defaults>
</compile_context>

<pallas_src>
import jax
import jax.numpy as jnp
from jax.experimental import pallas as pl
from jax.experimental.pallas import tpu as pltpu


def _disc_kernel(b_ref, x1a_ref, x2a_ref, x1b_ref, x2b_ref, w1_ref, w2_ref, o_ref):
    # b_ref: SMEM (2,) f32 — [bias_head1, bias_head2]
    # x*_ref: VMEM (tm, F); w*_ref: VMEM (F, F); o_ref: VMEM (tm, 2)
    # Head 1: logits_rdt
    t1 = jnp.dot(x1a_ref[...], w1_ref[...], preferred_element_type=jnp.float32)
    s1 = jnp.sum(t1 * x2a_ref[...].astype(jnp.float32), axis=-1, keepdims=True)
    s1 = s1 + b_ref[0]
    # Head 2: logits_rec
    t2 = jnp.dot(x1b_ref[...], w2_ref[...], preferred_element_type=jnp.float32)
    s2 = jnp.sum(t2 * x2b_ref[...].astype(jnp.float32), axis=-1, keepdims=True)
    s2 = s2 + b_ref[1]
    # One packed store for both heads.
    o_ref[...] = jnp.concatenate([s1, s2], axis=-1).astype(o_ref.dtype)


def _row_tile(n: int, f: int) -> int:
    """Largest sublane-aligned row tile keeping 4 double-buffered f32 input
    tiles within ~8 MiB of VMEM (fits v5e/v6e/v7x scoped defaults)."""
    bytes_per_row = 4 * f * 4 * 2            # 4 inputs x f32 x double buffer
    max_rows = max(8, ((8 * 1024 * 1024) // bytes_per_row) // 8 * 8)
    want = -(-n // 8) * 8                    # round n up to a sublane multiple
    return max(8, min(want, max_rows))


@jax.jit
def _fused_bilinear(bias2, x1a, x2a, x1b, x2b, w1, w2):
    """Fused pair of nn.Bilinear(F, F, 1) heads.

    bias2: (2,) f32, x*: (N, F), w*: (F, F)  ->  packed logits (N, 2)
    """
    n, f = x1a.shape
    tm = _row_tile(n, f)
    grid = (pl.cdiv(n, tm),)
    out_dtype = jnp.result_type(x1a.dtype, w1.dtype)

    cost = pl.CostEstimate(
        flops=int(n) * (4 * f * f + 8 * f),
        transcendentals=0,
        bytes_accessed=(4 * n * f * x1a.dtype.itemsize
                        + 2 * f * f * w1.dtype.itemsize
                        + n * 2 * jnp.dtype(out_dtype).itemsize),
    )

    grid_spec = pltpu.PrefetchScalarGridSpec(
        num_scalar_prefetch=0,
        grid=grid,
        in_specs=[
            # Biases: loop-invariant scalars -> SMEM, no VMEM tile / DMA block.
            pl.BlockSpec(memory_space=pltpu.MemorySpace.SMEM),
            pl.BlockSpec((tm, f), lambda i: (i, 0)),   # readout_emb tile
            pl.BlockSpec((tm, f), lambda i: (i, 0)),   # anchor_emb_1 tile
            pl.BlockSpec((tm, f), lambda i: (i, 0)),   # rec_emb tile
            pl.BlockSpec((tm, f), lambda i: (i, 0)),   # anchor_emb_2 tile
            pl.BlockSpec((f, f), lambda i: (0, 0)),    # W1 (resident)
            pl.BlockSpec((f, f), lambda i: (0, 0)),    # W2 (resident)
        ],
        out_specs=pl.BlockSpec((tm, 2), lambda i: (i, 0)),
    )

    return pl.pallas_call(
        _disc_kernel,
        out_shape=jax.ShapeDtypeStruct((n, 2), out_dtype),
        grid_spec=grid_spec,
        compiler_params=pltpu.CompilerParams(
            dimension_semantics=("parallel",),
        ),
        cost_estimate=cost,
    )(bias2, x1a, x2a, x1b, x2b, w1, w2)


def init_discriminator_params(key, out_feats):
    """Deterministic synthetic init matching the PyTorch module's parameters.

    nn.Bilinear(F, F, 1): weight (1, F, F) xavier_uniform_, bias (1,) zeros.
    """
    k1, k2 = jax.random.split(key)
    fan_in = out_feats * out_feats   # torch fan-in for (1, F, F)
    fan_out = out_feats              # torch fan-out for (1, F, F)
    bound = (6.0 / (fan_in + fan_out)) ** 0.5
    w1 = jax.random.uniform(k1, (out_feats, out_feats), jnp.float32, -bound, bound)
    w2 = jax.random.uniform(k2, (out_feats, out_feats), jnp.float32, -bound, bound)
    b1 = jnp.zeros((1,), jnp.float32)
    b2 = jnp.zeros((1,), jnp.float32)
    return {"w1": w1, "b1": b1, "w2": w2, "b2": b2}


def discriminator_forward(params, readout_emb, rec_emb, anchor_emb_1, anchor_emb_2):
    """Matches Discriminator.forward: returns (logits_rdt, logits_rec), each (N, 1)."""
    bias2 = jnp.concatenate([params["b1"], params["b2"]]).astype(jnp.float32)
    packed = _fused_bilinear(
        bias2,
        readout_emb, anchor_emb_1,   # head 1
        rec_emb, anchor_emb_2,       # head 2
        params["w1"], params["w2"],
    )
    return packed[:, 0:1], packed[:, 1:2]


def _reference_bilinear(x1, w, x2, b):
    return jnp.sum((x1 @ w) * x2, axis=-1, keepdims=True) + b[0]


if __name__ == "__main__":
    key = jax.random.PRNGKey(0)
    out_feats = 32   # hidden dim F
    n_nodes = 8      # batch of node embeddings

    kp, k1, k2, k3, k4, kb = jax.random.split(key, 6)
    params = init_discriminator_params(kp, out_feats)

    readout_emb = jax.random.normal(k1, (n_nodes, out_feats), jnp.float32)
    rec_emb = jax.random.normal(k2, (n_nodes, out_feats), jnp.float32)
    anchor_emb_1 = jax.random.normal(k3, (n_nodes, out_feats), jnp.float32)
    anchor_emb_2 = jax.random.normal(k4, (n_nodes, out_feats), jnp.float32)

    logits_rdt, logits_rec = discriminator_forward(
        params, readout_emb, rec_emb, anchor_emb_1, anchor_emb_2
    )
    jax.block_until_ready((logits_rdt, logits_rec))

    # correctness check against pure-JAX reference (zero bias, as in torch init)
    ref_rdt = _reference_bilinear(readout_emb, params["w1"], anchor_emb_1, params["b1"])
    ref_rec = _reference_bilinear(rec_emb, params["w2"], anchor_emb_2, params["b2"])
    assert jnp.allclose(logits_rdt, ref_rdt, atol=1e-5), "logits_rdt mismatch"
    assert jnp.allclose(logits_rec, ref_rec, atol=1e-5), "logits_rec mismatch"
    assert logits_rdt.shape == (n_nodes, 1) and logits_rec.shape == (n_nodes, 1)

    # also exercise the SMEM bias path with nonzero biases
    params_nz = dict(params)
    params_nz["b1"] = jax.random.normal(kb, (1,), jnp.float32)
    params_nz["b2"] = -params_nz["b1"]
    nz_rdt, nz_rec = discriminator_forward(
        params_nz, readout_emb, rec_emb, anchor_emb_1, anchor_emb_2
    )
    jax.block_until_ready((nz_rdt, nz_rec))
    ref_nz_rdt = _reference_bilinear(readout_emb, params_nz["w1"], anchor_emb_1, params_nz["b1"])
    ref_nz_rec = _reference_bilinear(rec_emb, params_nz["w2"], anchor_emb_2, params_nz["b2"])
    assert jnp.allclose(nz_rdt, ref_nz_rdt, atol=1e-5), "nonzero-bias logits_rdt mismatch"
    assert jnp.allclose(nz_rec, ref_nz_rec, atol=1e-5), "nonzero-bias logits_rec mismatch"

    # ragged N (not a sublane multiple): relies on Pallas boundary masking,
    # no wrapper-side padding copies.
    n_rag = 13
    kr1, kr2, kr3, kr4 = jax.random.split(kb, 4)
    r_read = jax.random.normal(kr1, (n_rag, out_feats), jnp.float32)
    r_rec = jax.random.normal(kr2, (n_rag, out_feats), jnp.float32)
    r_a1 = jax.random.normal(kr3, (n_rag, out_feats), jnp.float32)
    r_a2 = jax.random.normal(kr4, (n_rag, out_feats), jnp.float32)
    rag_rdt, rag_rec = discriminator_forward(params, r_read, r_rec, r_a1, r_a2)
    jax.block_until_ready((rag_rdt, rag_rec))
    ref_rag_rdt = _reference_bilinear(r_read, params["w1"], r_a1, params["b1"])
    ref_rag_rec = _reference_bilinear(r_rec, params["w2"], r_a2, params["b2"])
    assert jnp.allclose(rag_rdt, ref_rag_rdt, atol=1e-5), "ragged logits_rdt mismatch"
    assert jnp.allclose(rag_rec, ref_rag_rec, atol=1e-5), "ragged logits_rec mismatch"
    assert rag_rdt.shape == (n_rag, 1) and rag_rec.shape == (n_rag, 1)

    print("KERNEL_OK")
</pallas_src>

<mosaic_0001>
module attributes {stable_mosaic.version = 11 : i64} {
  func.func @_disc_kernel(%arg0: i32, %arg1: memref<2xf32, #tpu.memory_space<smem>>, %arg2: memref<8x32xf32, #tpu.memory_space<vmem>>, %arg3: memref<8x32xf32, #tpu.memory_space<vmem>>, %arg4: memref<8x32xf32, #tpu.memory_space<vmem>>, %arg5: memref<8x32xf32, #tpu.memory_space<vmem>>, %arg6: memref<32x32xf32, #tpu.memory_space<vmem>>, %arg7: memref<32x32xf32, #tpu.memory_space<vmem>>, %arg8: memref<8x2xf32, #tpu.memory_space<vmem>>) attributes {dimension_semantics = [#tpu.dimension_semantics<parallel>], iteration_bounds = array<i64: 1>, scalar_prefetch = 0 : i64, scratch_operands = 0 : i64, tpu.core_type = #tpu.core_type<tc>, window_params = [{transform_indices = @transform_0, window_bounds = array<i64: 2>}, {transform_indices = @transform_1, window_bounds = array<i64: 8, 32>}, {transform_indices = @transform_2, window_bounds = array<i64: 8, 32>}, {transform_indices = @transform_3, window_bounds = array<i64: 8, 32>}, {transform_indices = @transform_4, window_bounds = array<i64: 8, 32>}, {pipeline_mode = #tpu.pipeline_mode<synchronous>, transform_indices = @transform_5, window_bounds = array<i64: 32, 32>}, {pipeline_mode = #tpu.pipeline_mode<synchronous>, transform_indices = @transform_6, window_bounds = array<i64: 32, 32>}, {transform_indices = @transform_7, window_bounds = array<i64: 8, 2>}]} {
    %c0 = arith.constant 0 : index
    %c0_0 = arith.constant 0 : index
    %0 = vector.load %arg2[%c0, %c0_0] : memref<8x32xf32, #tpu.memory_space<vmem>>, vector<8x32xf32>
    %c0_1 = arith.constant 0 : index
    %c0_2 = arith.constant 0 : index
    %1 = vector.load %arg6[%c0_1, %c0_2] : memref<32x32xf32, #tpu.memory_space<vmem>>, vector<32x32xf32>
    %cst = arith.constant dense<0.000000e+00> : vector<8x32xf32>
    %2 = tpu.matmul %0, %1, %cst {dimension_numbers = #tpu.dot_dimension_numbers<[1], [0], [0], [1], [0, 0, 1, 1], [], []>} : vector<8x32xf32>, vector<32x32xf32>, vector<8x32xf32> -> vector<8x32xf32>
    %c0_3 = arith.constant 0 : index
    %c0_4 = arith.constant 0 : index
    %3 = vector.load %arg3[%c0_3, %c0_4] : memref<8x32xf32, #tpu.memory_space<vmem>>, vector<8x32xf32>
    %4 = arith.mulf %2, %3 : vector<8x32xf32>
    %cst_5 = arith.constant dense<0.000000e+00> : vector<8xf32>
    %5 = vector.multi_reduction <add>, %4, %cst_5 [1] : vector<8x32xf32> to vector<8xf32>
    %6 = vector.shape_cast %5 : vector<8xf32> to vector<8x1xf32>
    %c0_6 = arith.constant 0 : index
    %7 = memref.load %arg1[%c0_6] : memref<2xf32, #tpu.memory_space<smem>>
    %8 = vector.broadcast %7 : f32 to vector<8x1xf32>
    %9 = arith.addf %6, %8 : vector<8x1xf32>
    %c0_7 = arith.constant 0 : index
    %c0_8 = arith.constant 0 : index
    %10 = vector.load %arg4[%c0_7, %c0_8] : memref<8x32xf32, #tpu.memory_space<vmem>>, vector<8x32xf32>
    %c0_9 = arith.constant 0 : index
    %c0_10 = arith.constant 0 : index
    %11 = vector.load %arg7[%c0_9, %c0_10] : memref<32x32xf32, #tpu.memory_space<vmem>>, vector<32x32xf32>
    %cst_11 = arith.constant dense<0.000000e+00> : vector<8x32xf32>
    %12 = tpu.matmul %10, %11, %cst_11 {dimension_numbers = #tpu.dot_dimension_numbers<[1], [0], [0], [1], [0, 0, 1, 1], [], []>} : vector<8x32xf32>, vector<32x32xf32>, vector<8x32xf32> -> vector<8x32xf32>
    %c0_12 = arith.constant 0 : index
    %c0_13 = arith.constant 0 : index
    %13 = vector.load %arg5[%c0_12, %c0_13] : memref<8x32xf32, #tpu.memory_space<vmem>>, vector<8x32xf32>
    %14 = arith.mulf %12, %13 : vector<8x32xf32>
    %cst_14 = arith.constant dense<0.000000e+00> : vector<8xf32>
    %15 = vector.multi_reduction <add>, %14, %cst_14 [1] : vector<8x32xf32> to vector<8xf32>
    %16 = vector.shape_cast %15 : vector<8xf32> to vector<8x1xf32>
    %c1 = arith.constant 1 : index
    %17 = memref.load %arg1[%c1] : memref<2xf32, #tpu.memory_space<smem>>
    %18 = vector.broadcast %17 : f32 to vector<8x1xf32>
    %19 = arith.addf %16, %18 : vector<8x1xf32>
    %20 = tpu.concatenate %9, %19 in 1 : vector<8x1xf32>, vector<8x1xf32> -> vector<8x2xf32>
    %c0_15 = arith.constant 0 : index
    %c0_16 = arith.constant 0 : index
    %21 = vector.load %arg8[%c0_15, %c0_16] : memref<8x2xf32, #tpu.memory_space<vmem>>, vector<8x2xf32>
    tpu.vector_store %arg8[%c0_15, %c0_16], %20 {strides = array<i32>} : memref<8x2xf32, #tpu.memory_space<vmem>>, vector<8x2xf32>,
    return
  }
  func.func @transform_0(%arg0: i32) -> i32 {
    %c0_i32 = arith.constant 0 : i32
    %c0_i32_0 = arith.constant 0 : i32
    return %c0_i32 : i32
  }
  func.func @transform_1(%arg0: i32) -> (i32, i32) {
    %c0_i32 = arith.constant 0 : i32
    %c0_i32_0 = arith.constant 0 : i32
    return %arg0, %c0_i32 : i32, i32
  }
  func.func @transform_2(%arg0: i32) -> (i32, i32) {
    %c0_i32 = arith.constant 0 : i32
    %c0_i32_0 = arith.constant 0 : i32
    return %arg0, %c0_i32 : i32, i32
  }
  func.func @transform_3(%arg0: i32) -> (i32, i32) {
    %c0_i32 = arith.constant 0 : i32
    %c0_i32_0 = arith.constant 0 : i32
    return %arg0, %c0_i32 : i32, i32
  }
  func.func @transform_4(%arg0: i32) -> (i32, i32) {
    %c0_i32 = arith.constant 0 : i32
    %c0_i32_0 = arith.constant 0 : i32
    return %arg0, %c0_i32 : i32, i32
  }
  func.func @transform_5(%arg0: i32) -> (i32, i32) {
    %c0_i32 = arith.constant 0 : i32
    %c0_i32_0 = arith.constant 0 : i32
    %c0_i32_1 = arith.constant 0 : i32
    return %c0_i32, %c0_i32_0 : i32, i32
  }
  func.func @transform_6(%arg0: i32) -> (i32, i32) {
    %c0_i32 = arith.constant 0 : i32
    %c0_i32_0 = arith.constant 0 : i32
    %c0_i32_1 = arith.constant 0 : i32
    return %c0_i32, %c0_i32_0 : i32, i32
  }
  func.func @transform_7(%arg0: i32) -> (i32, i32) {
    %c0_i32 = arith.constant 0 : i32
    %c0_i32_0 = arith.constant 0 : i32
    return %arg0, %c0_i32 : i32, i32
  }
}

</mosaic_0001>

<llo_original>
// kernel: _fused_bilinear.1
$region0: #{_fused_bilinear.1}
  #allocation0 [shape = 'u32[]', space=smem, size = 0x4, offset = 0x4, fixed_abs, tag = 'smem constant byte address 0x4 - core index']
  #allocation1 [shape = 'u32[144,128]{1,0:T(1,128)}', space=vmem, size = 0x12000, scoped, tag = 'internal scratch']
  %s0 = inlined_call_operand.hbm [shape: f32[2], index: 0, kind: input, shape index: {}]
  %s1 = inlined_call_operand.hbm [shape: f32[8,32], index: 1, kind: input, shape index: {}]
  %s2 = inlined_call_operand.hbm [shape: f32[8,32], index: 2, kind: input, shape index: {}]
  %s3 = inlined_call_operand.hbm [shape: f32[8,32], index: 3, kind: input, shape index: {}]
  %s4 = inlined_call_operand.hbm [shape: f32[8,32], index: 4, kind: input, shape index: {}]
  %s5 = inlined_call_operand.hbm [shape: f32[32,32], index: 5, kind: input, shape index: {}]
  %s6 = inlined_call_operand.hbm [shape: f32[32,32], index: 6, kind: input, shape index: {}]
  %s7 = inlined_call_operand.vmem [shape: f32[8,2], index: 7, kind: output, shape index: {}]
  %s8 = sld [smem:[#allocation0]]
  $region66: #{_fused_bilinear.1} parent=0
    _
  %s10 = ssub.s32 1, %s8
  %s11 = scalar_select 0, %s10, %s8
  $region1: #{_fused_bilinear.1} parent=0
    #allocation2 [shape = 'u8[512]{0}', space=smem, size = 0x200, scoped, tag = 'input window, operand 0, single buffered']
    #allocation3 [shape = 's32[1]{0}', space=sflag, size = 0x4, scoped, tag = 'scoped memory for _fused_bilinear.1']
    #allocation4 [shape = 's32[1]{0}', space=sflag, size = 0x4, scoped, tag = 'scoped memory for _fused_bilinear.1']
    #allocation5 [shape = 'u8[4096]{0}', space=vmem, size = 0x1000, scoped, tag = 'input window, operand 1, single buffered']
    #allocation6 [shape = 'u8[4096]{0}', space=vmem, size = 0x1000, scoped, tag = 'input window, operand 2, single buffered']
    #allocation7 [shape = 's32[1]{0}', space=sflag, size = 0x4, scoped, tag = 'scoped memory for _fused_bilinear.1']
    #allocation8 [shape = 'u8[4096]{0}', space=vmem, size = 0x1000, scoped, tag = 'input window, operand 3, single buffered']
    #allocation9 [shape = 'u8[4096]{0}', space=vmem, size = 0x1000, scoped, tag = 'input window, operand 4, single buffered']
    #allocation10 [shape = 's32[1]{0}', space=sflag, size = 0x4, scoped, tag = 'scoped memory for _fused_bilinear.1']
    #allocation11 [shape = 'u8[16384]{0}', space=vmem, size = 0x4000, scoped, tag = 'input window, operand 5, single buffered']
    #allocation12 [shape = 'u8[16384]{0}', space=vmem, size = 0x4000, scoped, tag = 'input window, operand 6, single buffered']
    #allocation13 [shape = 's32[1]{0}', space=sflag, size = 0x4, scoped, tag = 'scoped memory for _fused_bilinear.1']
    %12 = vsyncpa [#allocation4], 0
    %13 = vsyncpa [#allocation3], 0
    %14 = vsyncpa [#allocation7], 0
    %15 = vsyncpa [#allocation10], 0
    %16 = vsyncpa [#allocation13], 0
    // Predicated region
    $region2: #{_fused_bilinear.1} parent=1 // pred_check
      _
    $region3: #{_fused_bilinear.1} parent=1 // pred_check_branch
      %18 = sbr.rel (0) target = $region5
    $region4: #{_fused_bilinear.1} parent=1 // pred_region
      %s20 = ssub.s32 16, 16
      %21 = vsyncadd [#allocation4], %s20
      %24 = dma.hbm_to_smem %s0, 16, [#allocation2], [#allocation4]
    $region5: #{_fused_bilinear.1} parent=1 // pred_fallthru
      _
    // Predicated region
    $region6: #{_fused_bilinear.1} parent=1 // pred_check
      _
    $region7: #{_fused_bilinear.1} parent=1 // pred_check_branch
      %26 = sbr.rel (0) target = $region9
    $region8: #{_fused_bilinear.1} parent=1 // pred_region
      %s28 = ssub.s32 128, 128
      %29 = vsyncadd [#allocation3], %s28
      %s31 = sshll.u32 [#allocation5], 4
      %s32 = int_to_ptr.vmem [resolvable:$true] %s31
      %34 = dma.hbm_to_vmem [thread:$0]  %s1, 128, %s32, [#allocation3]
    $region9: #{_fused_bilinear.1} parent=1 // pred_fallthru
      _
    // Predicated region
    $region10: #{_fused_bilinear.1} parent=1 // pred_check
      _
    $region11: #{_fused_bilinear.1} parent=1 // pred_check_branch
      %36 = sbr.rel (0) target = $region13
    $region12: #{_fused_bilinear.1} parent=1 // pred_region
      %s38 = ssub.s32 128, 128
      %39 = vsyncadd [#allocation7], %s38
      %s41 = sshll.u32 [#allocation6], 4
      %s42 = int_to_ptr.vmem [resolvable:$true] %s41
      %44 = dma.hbm_to_vmem [thread:$0]  %s2, 128, %s42, [#allocation7]
    $region13: #{_fused_bilinear.1} parent=1 // pred_fallthru
      _
    // Predicated region
    $region14: #{_fused_bilinear.1} parent=1 // pred_check
      _
    $region15: #{_fused_bilinear.1} parent=1 // pred_check_branch
      %46 = sbr.rel (0) target = $region17
    $region16: #{_fused_bilinear.1} parent=1 // pred_region
      %s48 = ssub.s32 128, 128
      %49 = vsyncadd [#allocation7], %s48
      %s51 = sshll.u32 [#allocation8], 4
      %s52 = int_to_ptr.vmem [resolvable:$true] %s51
      %54 = dma.hbm_to_vmem [thread:$0]  %s3, 128, %s52, [#allocation7]
    $region17: #{_fused_bilinear.1} parent=1 // pred_fallthru
      _
    // Predicated region
    $region18: #{_fused_bilinear.1} parent=1 // pred_check
      _
    $region19: #{_fused_bilinear.1} parent=1 // pred_check_branch
      %56 = sbr.rel (0) target = $region21
    $region20: #{_fused_bilinear.1} parent=1 // pred_region
      %s58 = ssub.s32 128, 128
      %59 = vsyncadd [#allocation10], %s58
      %s61 = sshll.u32 [#allocation9], 4
      %s62 = int_to_ptr.vmem [resolvable:$true] %s61
      %64 = dma.hbm_to_vmem [thread:$0]  %s4, 128, %s62, [#allocation10]
    $region21: #{_fused_bilinear.1} parent=1 // pred_fallthru
      _
    // Predicated region
    $region22: #{_fused_bilinear.1} parent=1 // pred_check
      _
    $region23: #{_fused_bilinear.1} parent=1 // pred_check_branch
      %66 = sbr.rel (0) target = $region25
    $region24: #{_fused_bilinear.1} parent=1 // pred_region
      %s68 = ssub.s32 512, 512
      %69 = vsyncadd [#allocation10], %s68
      %s70 = sshll.u32 [#allocation11], 4
      %s71 = int_to_ptr.vmem [resolvable:$true] %s70
      %76 = dma.hbm_to_vmem [thread:$0]  %s5, 512, %s71, [#allocation10], 128, 128, 8
    $region25: #{_fused_bilinear.1} parent=1 // pred_fallthru
      _
    // Predicated region
    $region26: #{_fused_bilinear.1} parent=1 // pred_check
      _
    $region27: #{_fused_bilinear.1} parent=1 // pred_check_branch
      %78 = sbr.rel (0) target = $region29
    $region28: #{_fused_bilinear.1} parent=1 // pred_region
      %s80 = ssub.s32 512, 512
      %81 = vsyncadd [#allocation13], %s80
      %s82 = sshll.u32 [#allocation12], 4
      %s83 = int_to_ptr.vmem [resolvable:$true] %s82
      %88 = dma.hbm_to_vmem [thread:$0]  %s6, 512, %s83, [#allocation13], 128, 128, 8
    $region29: #{_fused_bilinear.1} parent=1 // pred_fallthru
      _
    // Predicated region
    $region30: #{_fused_bilinear.1} parent=1 // pred_check
      _
    $region31: #{_fused_bilinear.1} parent=1 // pred_check_branch
      %90 = sbr.rel (0) target = $region33
    $region32: #{_fused_bilinear.1} parent=1 // pred_region
      %91 = dma.done [#allocation4], 16
    $region33: #{_fused_bilinear.1} parent=1 // pred_fallthru
      _
    // Predicated region
    $region34: #{_fused_bilinear.1} parent=1 // pred_check
      _
    $region35: #{_fused_bilinear.1} parent=1 // pred_check_branch
      %93 = sbr.rel (0) target = $region37
    $region36: #{_fused_bilinear.1} parent=1 // pred_region
      %94 = dma.done [#allocation3], 128
    $region37: #{_fused_bilinear.1} parent=1 // pred_fallthru
      _
    // Predicated region
    $region38: #{_fused_bilinear.1} parent=1 // pred_check
      _
    $region39: #{_fused_bilinear.1} parent=1 // pred_check_branch
      %96 = sbr.rel (0) target = $region41
    $region40: #{_fused_bilinear.1} parent=1 // pred_region
      %97 = dma.done [#allocation7], 128
    $region41: #{_fused_bilinear.1} parent=1 // pred_fallthru
      _
    // Predicated region
    $region42: #{_fused_bilinear.1} parent=1 // pred_check
      _
    $region43: #{_fused_bilinear.1} parent=1 // pred_check_branch
      %99 = sbr.rel (0) target = $region45
    $region44: #{_fused_bilinear.1} parent=1 // pred_region
      %100 = dma.done [#allocation7], 128
    $region45: #{_fused_bilinear.1} parent=1 // pred_fallthru
      _
    // Predicated region
    $region46: #{_fused_bilinear.1} parent=1 // pred_check
      _
    $region47: #{_fused_bilinear.1} parent=1 // pred_check_branch
      %102 = sbr.rel (0) target = $region49
    $region48: #{_fused_bilinear.1} parent=1 // pred_region
      %103 = dma.done [#allocation10], 128
    $region49: #{_fused_bilinear.1} parent=1 // pred_fallthru
      _
    // Predicated region
    $region50: #{_fused_bilinear.1} parent=1 // pred_check
      _
    $region51: #{_fused_bilinear.1} parent=1 // pred_check_branch
      %105 = sbr.rel (0) target = $region53
    $region52: #{_fused_bilinear.1} parent=1 // pred_region
      %106 = dma.done [#allocation10], 512
    $region53: #{_fused_bilinear.1} parent=1 // pred_fallthru
      _
    // Predicated region
    $region54: #{_fused_bilinear.1} parent=1 // pred_check
      _
    $region55: #{_fused_bilinear.1} parent=1 // pred_check_branch
      %108 = sbr.rel (0) target = $region57
    $region56: #{_fused_bilinear.1} parent=1 // pred_region
      %109 = dma.done [#allocation13], 512
    $region57: #{_fused_bilinear.1} parent=1 // pred_fallthru
      _
    %110 = sfence
    %v111 = vld [vmem:[#allocation5] sm:$0xff]
    %v112 = vld [vmem:[#allocation11] sm:$0xff]
    %v113 = vld [vmem:[#allocation11 + $0x8] sm:$0xff]
    %v114 = vld [vmem:[#allocation11 + $0x10] sm:$0xff]
    %v115 = vld [vmem:[#allocation11 + $0x18] sm:$0xff]
    %vm116 = vcmask 261120
    %v118 = vsel %vm116, %v111, 0
    %120 = vmatprep.subr.mxu0 0.0
    %121 = vmatpush1.msra.mxu0 0.0
    %122 = vmatprep.subr.mxu0 0.0
    %123 = vmatpush1.msra.mxu0 0.0
    %124 = vmatprep.subr.mxu0 0.0
    %125 = vmatpush1.msra.mxu0 0.0
    %126 = vmatprep.subr.mxu0 0.0
    %127 = vmatpush1.msra.mxu0 0.0
    %128 = vmatprep.subr.mxu0 0.0
    %129 = vmatpush1.msra.mxu0 0.0
    %130 = vmatprep.subr.mxu0 0.0
    %131 = vmatpush1.msra.mxu0 0.0
    %132 = vmatprep.subr.mxu0 0.0
    %133 = vmatpush1.msra.mxu0 0.0
    %134 = vmatprep.subr.mxu0 0.0
    %135 = vmatpush1.msra.mxu0 0.0
    %136 = vmatprep.subr.mxu0 0.0
    %137 = vmatpush1.msra.mxu0 0.0
    %138 = vmatprep.subr.mxu0 0.0
    %139 = vmatpush1.msra.mxu0 0.0
    %140 = vmatprep.subr.mxu0 0.0
    %141 = vmatpush1.msra.mxu0 0.0
    %142 = vmatprep.subr.mxu0 0.0
    %143 = vmatpush1.msra.mxu0 0.0
    %144 = vmatprep.subr.mxu0 0.0
    %145 = vmatpush1.msra.mxu0 %v115
    %146 = vmatprep.subr.mxu0 0.0
    %147 = vmatpush1.msra.mxu0 %v114
    %148 = vmatprep.subr.mxu0 0.0
    %149 = vmatpush1.msra.mxu0 %v113
    %150 = vmatprep.subr.mxu0 0.0
    %151 = vmatpush1.msra.mxu0 %v112
    %152 = vmatprep.subr.mxu0 0.0
    %153 = vmatpush2.msra.mxu0 0.0
    %154 = vmatprep.subr.mxu0 0.0
    %155 = vmatpush2.msra.mxu0 0.0
    %156 = vmatprep.subr.mxu0 0.0
    %157 = vmatpush2.msra.mxu0 0.0
    %158 = vmatprep.subr.mxu0 0.0
    %159 = vmatpush2.msra.mxu0 0.0
    %160 = vmatprep.subr.mxu0 0.0
    %161 = vmatpush2.msra.mxu0 0.0
    %162 = vmatprep.subr.mxu0 0.0
    %163 = vmatpush2.msra.mxu0 0.0
    %164 = vmatprep.subr.mxu0 0.0
    %165 = vmatpush2.msra.mxu0 0.0
    %166 = vmatprep.subr.mxu0 0.0
    %167 = vmatpush2.msra.mxu0 0.0
    %168 = vmatprep.subr.mxu0 0.0
    %169 = vmatpush2.msra.mxu0 0.0
    %170 = vmatprep.subr.mxu0 0.0
    %171 = vmatpush2.msra.mxu0 0.0
    %172 = vmatprep.subr.mxu0 0.0
    %173 = vmatpush2.msra.mxu0 0.0
    %174 = vmatprep.subr.mxu0 0.0
    %175 = vmatpush2.msra.mxu0 0.0
    %176 = vmatprep.subr.mxu0 0.0
    %177 = vmatpush2.msra.mxu0 0.0
    %178 = vmatprep.subr.mxu0 0.0
    %179 = vmatpush2.msra.mxu0 0.0
    %180 = vmatprep.subr.mxu0 0.0
    %181 = vmatpush2.msra.mxu0 0.0
    %182 = vmatprep.subr.mxu0 0.0
    %183 = vmatpush2.msra.mxu0 0.0
    %184 = vmatprep.mubr.f32.mxu0 0.0
    %185 = vmatmul.mubr.f32.gmra.mxu0 %v118
    %v186 = vpop.f32.mrf.mxu0
    %v187 = vadd.f32 0.0, %v186
    %v188 = vpop.f32.mrf.mxu0
    %189 = vdwg.mxu0
    %v190 = vld [vmem:[#allocation6] sm:$0xff]
    %v191 = vmul.f32 %v187, %v190
    %v192 = vsel %vm116, %v191, 0.0
    %193 = vadd.xlane.f32.xlu0 %v192
    %v194 = vpop.xlane.xlu0 %193
    %s195 = sld [smem:[#allocation2]]
    %v196 = vstv %s195
    %v197 = vadd.f32 %v194, %v196
    %v198 = vld [vmem:[#allocation8] sm:$0xff]
    %v199 = vld [vmem:[#allocation12] sm:$0xff]
    %v200 = vld [vmem:[#allocation12 + $0x8] sm:$0xff]
    %v201 = vld [vmem:[#allocation12 + $0x10] sm:$0xff]
    %v202 = vld [vmem:[#allocation12 + $0x18] sm:$0xff]
    %v204 = vsel %vm116, %v198, 0
    %206 = vmatprep.subr.mxu0 0.0
    %207 = vmatpush1.msra.mxu0 0.0
    %208 = vmatprep.subr.mxu0 0.0
    %209 = vmatpush1.msra.mxu0 0.0
    %210 = vmatprep.subr.mxu0 0.0
    %211 = vmatpush1.msra.mxu0 0.0
    %212 = vmatprep.subr.mxu0 0.0
    %213 = vmatpush1.msra.mxu0 0.0
    %214 = vmatprep.subr.mxu0 0.0
    %215 = vmatpush1.msra.mxu0 0.0
    %216 = vmatprep.subr.mxu0 0.0
    %217 = vmatpush1.msra.mxu0 0.0
    %218 = vmatprep.subr.mxu0 0.0
    %219 = vmatpush1.msra.mxu0 0.0
    %220 = vmatprep.subr.mxu0 0.0
    %221 = vmatpush1.msra.mxu0 0.0
    %222 = vmatprep.subr.mxu0 0.0
    %223 = vmatpush1.msra.mxu0 0.0
    %224 = vmatprep.subr.mxu0 0.0
    %225 = vmatpush1.msra.mxu0 0.0
    %226 = vmatprep.subr.mxu0 0.0
    %227 = vmatpush1.msra.mxu0 0.0
    %228 = vmatprep.subr.mxu0 0.0
    %229 = vmatpush1.msra.mxu0 0.0
    %230 = vmatprep.subr.mxu0 0.0
    %231 = vmatpush1.msra.mxu0 %v202
    %232 = vmatprep.subr.mxu0 0.0
    %233 = vmatpush1.msra.mxu0 %v201
    %234 = vmatprep.subr.mxu0 0.0
    %235 = vmatpush1.msra.mxu0 %v200
    %236 = vmatprep.subr.mxu0 0.0
    %237 = vmatpush1.msra.mxu0 %v199
    %238 = vmatprep.subr.mxu0 0.0
    %239 = vmatpush2.msra.mxu0 0.0
    %240 = vmatprep.subr.mxu0 0.0
    %241 = vmatpush2.msra.mxu0 0.0
    %242 = vmatprep.subr.mxu0 0.0
    %243 = vmatpush2.msra.mxu0 0.0
    %244 = vmatprep.subr.mxu0 0.0
    %245 = vmatpush2.msra.mxu0 0.0
    %246 = vmatprep.subr.mxu0 0.0
    %247 = vmatpush2.msra.mxu0 0.0
    %248 = vmatprep.subr.mxu0 0.0
    %249 = vmatpush2.msra.mxu0 0.0
    %250 = vmatprep.subr.mxu0 0.0
    %251 = vmatpush2.msra.mxu0 0.0
    %252 = vmatprep.subr.mxu0 0.0
    %253 = vmatpush2.msra.mxu0 0.0
    %254 = vmatprep.subr.mxu0 0.0
    %255 = vmatpush2.msra.mxu0 0.0
    %256 = vmatprep.subr.mxu0 0.0
    %257 = vmatpush2.msra.mxu0 0.0
    %258 = vmatprep.subr.mxu0 0.0
    %259 = vmatpush2.msra.mxu0 0.0
    %260 = vmatprep.subr.mxu0 0.0
    %261 = vmatpush2.msra.mxu0 0.0
    %262 = vmatprep.subr.mxu0 0.0
    %263 = vmatpush2.msra.mxu0 0.0
    %264 = vmatprep.subr.mxu0 0.0
    %265 = vmatpush2.msra.mxu0 0.0
    %266 = vmatprep.subr.mxu0 0.0
    %267 = vmatpush2.msra.mxu0 0.0
    %268 = vmatprep.subr.mxu0 0.0
    %269 = vmatpush2.msra.mxu0 0.0
    %270 = vmatprep.mubr.f32.mxu0 0.0
    %271 = vmatmul.mubr.f32.gmra.mxu0 %v204
    %v272 = vpop.f32.mrf.mxu0
    %v273 = vadd.f32 0.0, %v272
    %v274 = vpop.f32.mrf.mxu0
    %275 = vdwg.mxu0
    %v276 = vld [vmem:[#allocation9] sm:$0xff]
    %v277 = vmul.f32 %v273, %v276
    %v278 = vsel %vm116, %v277, 0.0
    %279 = vadd.xlane.f32.xlu0 %v278
    %v280 = vpop.xlane.xlu0 %279
    %s281 = sld [smem:[#allocation2 + $0x1]]
    %v282 = vstv %s281
    %v283 = vadd.f32 %v280, %v282
    %vm284 = vcmask 7168
    %v285 = vsel %vm284, %v197, %v283
    %vm286 = vcmask 15360
    %287 = vst.msk [vmem:[%s7] sm:$0xff] %vm286, %v285
    // Predicated region
    $region58: #{_fused_bilinear.1} parent=1 // pred_check
      _
    $region59: #{_fused_bilinear.1} parent=1 // pred_check_branch
      %289 = sbr.rel (0) target = $region61
    $region60: #{_fused_bilinear.1} parent=1 // pred_region
      _
    $region61: #{_fused_bilinear.1} parent=1 // pred_fallthru
      _
    // Predicated region
    $region62: #{_fused_bilinear.1} parent=1 // pred_check
      _
    $region63: #{_fused_bilinear.1} parent=1 // pred_check_branch
      %291 = sbr.rel (0) target = $region65
    $region64: #{_fused_bilinear.1} parent=1 // pred_region
      _
    $region65: #{_fused_bilinear.1} parent=1 // pred_fallthru
      _
    %292 = vsyncpa [#allocation3], 1
    %293 = vsyncpa [#allocation7], 1
    %294 = vsyncpa [#allocation10], 1
    %295 = vsyncpa [#allocation13], 1
    %296 = vsyncpa [#allocation4], 1

</llo_original>
